<compile_context>
chip_gen: v6e
topology: v6e:2x2x1
jax: 0.10.0
libtpu: 0.0.40
codegen_flags: <defaults>
</compile_context>

<pallas_src>
import functools
import math

import jax
import jax.numpy as jnp
from jax.experimental import pallas as pl
from jax.experimental.pallas import tpu as pltpu

EPSILON = 1e-8  # stands in for constants.EPSILON in the reference code


# ---------------- helpers ----------------

def _pick_tile_co(c_out, cap=256):
    """C_out tile: full C_out if <= cap, else largest divisor <= cap that is a
    multiple of 8 (keeps every BlockSpec (8,128)-legal).  cap=256 fills the
    wider v6e/v7x MXU; on v5e a 256-row LHS simply becomes two 128 passes."""
    if c_out <= cap:
        return c_out
    for t in range(cap, 7, -8):
        if c_out % t == 0:
            return t
    # TODO(synk): masked last tile for C_out with no nice divisor.
    return c_out


def _vmem_limit_bytes(step_bytes):
    """Generation-aware scoped-VMEM limit sized from the per-step footprint."""
    try:
        cap = int(pltpu.get_tpu_info().vmem_capacity_bytes)
    except Exception:  # non-TPU / older jax: assume v5e/v6e physical VMEM
        cap = 128 * 1024 * 1024
    limit = max(2 * step_bytes + (8 << 20), 16 << 20)
    limit = min(limit, int(0.45 * cap))      # leave headroom (v7x has only 64 MiB)
    limit = max(limit, min(step_bytes + (4 << 20), int(0.9 * cap)))
    return int(limit)


# ---------------- Pallas kernels ----------------

def _conv_caps_kernel(x_ref, w_ref, b_ref, sel_ref, *rest,
                      k, wp, s_wide, fuse_squash):
    """One (batch image, C_out tile) step.

    x_ref:    (1, C_in, L)        bf16 row-flattened padded image
    w_ref:    (tile_co, k*k*C_in) bf16 weight, contraction ordered (kh, kw, ci)
    b_ref:    (tile_co, 1)        f32 bias
    sel_ref:  (S_wide, S)         f32 0/1 wide-position -> compact-position map
    rest:     (gmat, gmat_t, o)   if fuse_squash else (o,)
    """
    if fuse_squash:
        gmat_ref, gmat_t_ref, o_ref = rest
    else:
        (o_ref,) = rest

    # Stack the k*k shifted contiguous slabs along the contraction axis and run
    # ONE large-contraction MXU dot -> (tile_co, S_wide) f32 (no accumulator
    # scratch, no += round-trips).
    slabs = [x_ref[0, :, pl.ds(kh * wp + kw, s_wide)]
             for kh in range(k) for kw in range(k)]
    stacked = slabs[0] if len(slabs) == 1 else jnp.concatenate(slabs, axis=0)
    conv = jnp.dot(w_ref[...], stacked, preferred_element_type=jnp.float32)

    # Wide -> compact (and strided-position selection for stride > 1) via one
    # MXU matmul against a host-precomputed 0/1 matrix: lane-dense output, no
    # XLA compaction pass, no lane-strided loads.  Bias added once, in compact
    # coordinates.
    v = jnp.dot(conv, sel_ref[...], preferred_element_type=jnp.float32) + b_ref[...]

    if fuse_squash:
        # Capsule grouping matrices are host-precomputed and VMEM-resident.
        sq = jnp.dot(v * v, gmat_ref[...], preferred_element_type=jnp.float32)
        # squash: v * ||v||^2 / ((1 + ||v||^2) (||v|| + eps)), exact divide.
        scale = sq / ((1.0 + sq) * (jnp.sqrt(sq) + EPSILON))
        v = v * jnp.dot(scale, gmat_t_ref[...], preferred_element_type=jnp.float32)

    o_ref[0] = v.astype(o_ref.dtype)


def _squash_rows_kernel(x_ref, g_ref, gt_ref, o_ref):
    """Fallback squash (only when (Ho*Wo) % dim_capsule != 0): lane-dense rows,
    groups of d consecutive lanes, grouping matrices precomputed on the host."""
    x = x_ref[...]
    sq = jnp.dot(x * x, g_ref[...], preferred_element_type=jnp.float32)
    scale = sq / ((1.0 + sq) * (jnp.sqrt(sq) + EPSILON))
    o_ref[...] = (x * jnp.dot(scale, gt_ref[...], preferred_element_type=jnp.float32)
                  ).astype(o_ref.dtype)


def _squash_flat(flat, d):
    """Tiled, lane-dense squash over a flat vector of capsule-grouped values."""
    total = flat.shape[0]
    lb = (128 * d) // math.gcd(128, d)       # lane- and capsule-aligned row width
    if lb < 512:
        lb *= max(1, 512 // lb)
    tr = 256                                  # ~0.5 MiB per tile (HBM-roofline friendly)
    per_tile = tr * lb
    n_tiles = -(-total // per_tile)
    padded = n_tiles * per_tile
    if padded != total:
        flat = jnp.pad(flat, (0, padded - total))   # zero capsules squash to zero
    rows = flat.reshape(n_tiles * tr, lb).astype(jnp.float32)

    n_grp = lb // d
    gmat = (jnp.arange(lb)[:, None] // d
            == jnp.arange(n_grp)[None, :]).astype(jnp.float32)
    gmat_t = gmat.T

    step_bytes = 4 * (4 * tr * lb + 4 * lb * n_grp)
    out = pl.pallas_call(
        _squash_rows_kernel,
        out_shape=jax.ShapeDtypeStruct(rows.shape, jnp.float32),
        grid=(n_tiles,),
        in_specs=[pl.BlockSpec((tr, lb), lambda i: (i, 0)),
                  pl.BlockSpec((lb, n_grp), lambda i: (0, 0)),
                  pl.BlockSpec((n_grp, lb), lambda i: (0, 0))],
        out_specs=pl.BlockSpec((tr, lb), lambda i: (i, 0)),
        compiler_params=pltpu.CompilerParams(
            dimension_semantics=("parallel",),
            vmem_limit_bytes=_vmem_limit_bytes(step_bytes)),
    )(rows, gmat, gmat_t)
    return out.reshape(-1)[:total]


# ---------------- wrapper ----------------

def conv_capsule_forward(x, weight, bias, *, dim_capsule, stride=1, padding=0):
    """x: (B, C_in, H, W)  weight: (C_out, C_in, k, k)  bias: (C_out,)
    returns (B, num_capsules, dim_capsule) — same semantics as the PyTorch module."""
    B, C_in, H, W = x.shape
    C_out, C_in_w, k, k2 = weight.shape
    assert C_in_w == C_in and k == k2

    Hp, Wp = H + 2 * padding, W + 2 * padding
    Ho = (Hp - k) // stride + 1
    Wo = (Wp - k) // stride + 1
    S = Ho * Wo
    assert (C_out * S) % dim_capsule == 0, "C_out*Ho*Wo must be divisible by dim_capsule"

    # stride-1 "wide" geometry: wide rows keep the padded row pitch Wp so every
    # (kh, kw) offset is a contiguous slab of the flat image; stride>1 positions
    # are picked afterwards by the selection matmul (no lane-strided loads).
    H1 = Hp - k + 1
    S_w = H1 * Wp
    # one extra zero row at the bottom keeps the last slab slice in bounds
    xp = jnp.pad(x, ((0, 0), (0, 0), (padding, padding + 1), (padding, padding)))
    L = (Hp + 1) * Wp
    x_flat = xp.reshape(B, C_in, L).astype(jnp.bfloat16)       # bf16 MXU input

    K = k * k * C_in
    # weight as (C_out, k*k*C_in), contraction ordered (kh, kw, C_in) to match
    # the in-kernel slab stacking order.
    w_flat = jnp.transpose(weight, (0, 2, 3, 1)).reshape(C_out, K).astype(jnp.bfloat16)
    b_r = bias.reshape(C_out, 1).astype(jnp.float32)

    # wide-position -> compact-position one-hot selection (host precomputed,
    # VMEM-resident via constant index_map).
    wide_pos = (jnp.arange(Ho)[:, None] * (stride * Wp)
                + jnp.arange(Wo)[None, :] * stride).reshape(-1)           # (S,)
    sel = (jnp.arange(S_w)[:, None] == wide_pos[None, :]).astype(jnp.float32)

    tile_co = _pick_tile_co(C_out)
    n_co = C_out // tile_co
    fuse = (S % dim_capsule == 0)         # capsules never straddle channels

    inputs = [x_flat, w_flat, b_r, sel]
    in_specs = [
        pl.BlockSpec((1, C_in, L), lambda b, c: (b, 0, 0)),   # image resident across c
        pl.BlockSpec((tile_co, K), lambda b, c: (c, 0)),
        pl.BlockSpec((tile_co, 1), lambda b, c: (c, 0)),
        pl.BlockSpec((S_w, S), lambda b, c: (0, 0)),
    ]
    n_caps = S // dim_capsule if fuse else 0
    if fuse:
        gmat = (jnp.arange(S)[:, None] // dim_capsule
                == jnp.arange(n_caps)[None, :]).astype(jnp.float32)        # (S, n_caps)
        gmat_t = gmat.T                                                    # (n_caps, S)
        inputs += [gmat, gmat_t]
        in_specs += [pl.BlockSpec((S, n_caps), lambda b, c: (0, 0)),
                     pl.BlockSpec((n_caps, S), lambda b, c: (0, 0))]

    kernel = functools.partial(_conv_caps_kernel, k=k, wp=Wp, s_wide=S_w,
                               fuse_squash=fuse)

    # per-step VMEM footprint (double-buffered inputs/outputs + value temporaries)
    step_bytes = (2 * C_in * L * 2 + 2 * tile_co * K * 2 + 2 * tile_co * 4
                  + 2 * S_w * S * 4 + 2 * tile_co * S * 4
                  + K * S_w * 4 + 2 * tile_co * S_w * 4 + 2 * tile_co * S * 4)
    if fuse:
        step_bytes += 4 * S * n_caps * 4

    cost = pl.CostEstimate(
        flops=2 * B * C_out * S_w * K + 2 * B * C_out * S_w * S
              + (4 * B * C_out * S * n_caps if fuse else 0),
        transcendentals=(B * C_out * n_caps) if fuse else 0,
        bytes_accessed=2 * B * C_in * L + 2 * B * C_out * K + 4 * C_out
                       + 4 * S_w * S + (8 * S * n_caps if fuse else 0)
                       + 4 * B * C_out * S)

    compact = pl.pallas_call(
        kernel,
        out_shape=jax.ShapeDtypeStruct((B, C_out, S), jnp.float32),
        grid=(B, n_co),
        in_specs=in_specs,
        out_specs=pl.BlockSpec((1, tile_co, S), lambda b, c: (b, c, 0)),
        compiler_params=pltpu.CompilerParams(
            dimension_semantics=("parallel", "parallel"),
            vmem_limit_bytes=_vmem_limit_bytes(step_bytes)),
        cost_estimate=cost,
    )(*inputs)

    # Output is compact NCHW-flat per channel, so the capsule regrouping is a
    # pure reshape (matches torch's .view()).
    if fuse:
        return compact.reshape(B, -1, dim_capsule)

    # TODO(synk): when (Ho*Wo) % dim_capsule != 0 capsules straddle channels, so
    # the squash runs as a second lane-dense tiled Pallas pass.
    return _squash_flat(compact.reshape(-1), dim_capsule).reshape(B, -1, dim_capsule)


# ---------------- reference (pure JAX) for a sanity check ----------------

def _reference(x, weight, bias, *, dim_capsule, stride=1, padding=0):
    out = jax.lax.conv_general_dilated(
        x, weight, window_strides=(stride, stride),
        padding=[(padding, padding), (padding, padding)],
        dimension_numbers=("NCHW", "OIHW", "NCHW"),
        precision=jax.lax.Precision.HIGHEST)
    out = out + bias.reshape(1, -1, 1, 1)
    caps = out.reshape(x.shape[0], -1, dim_capsule)
    sq = jnp.sum(caps * caps, axis=-1, keepdims=True)
    norm = jnp.sqrt(sq)
    return (caps / (norm + EPSILON)) * (sq / (1.0 + sq))


if __name__ == "__main__":
    # Small shapes consistent with the module
    B, C_in, H, W = 2, 4, 16, 16
    C_out, k, stride, padding = 8, 3, 1, 0
    dim_capsule = 4

    key = jax.random.PRNGKey(0)
    kx, kw_, kb = jax.random.split(key, 3)
    x = jax.random.normal(kx, (B, C_in, H, W), dtype=jnp.float32)

    # Deterministic Conv2d-style init (uniform in +/- 1/sqrt(fan_in)).
    fan_in = C_in * k * k
    bound = 1.0 / math.sqrt(fan_in)
    weight = jax.random.uniform(kw_, (C_out, C_in, k, k), jnp.float32, -bound, bound)
    bias = jax.random.uniform(kb, (C_out,), jnp.float32, -bound, bound)

    out = conv_capsule_forward(x, weight, bias,
                               dim_capsule=dim_capsule, stride=stride, padding=padding)
    out = jax.block_until_ready(out)

    Ho = (H + 2 * padding - k) // stride + 1
    assert out.shape == (B, (C_out * Ho * Ho) // dim_capsule, dim_capsule), out.shape

    # Tight check: reference fed the same bf16-rounded matmul inputs (isolates
    # kernel structure from the intentional bf16 input cast).
    xb = x.astype(jnp.bfloat16).astype(jnp.float32)
    wb = weight.astype(jnp.bfloat16).astype(jnp.float32)
    ref_bf16 = _reference(xb, wb, bias, dim_capsule=dim_capsule,
                          stride=stride, padding=padding)
    err_t = float(jnp.max(jnp.abs(out - ref_bf16)))
    assert jnp.allclose(out, ref_bf16, atol=3e-2, rtol=3e-2), \
        f"mismatch vs bf16-input reference, max err {err_t}"

    # Loose check vs the full-f32 reference: tolerance accounts for the bf16
    # MXU inputs (perf-review requirement).
    ref = _reference(x, weight, bias, dim_capsule=dim_capsule,
                     stride=stride, padding=padding)
    err_l = float(jnp.max(jnp.abs(out - ref)))
    assert jnp.allclose(out, ref, atol=6e-2, rtol=6e-2), \
        f"mismatch vs f32 reference, max err {err_l}"

    print("KERNEL_OK")
</pallas_src>

<mosaic_0001>
module attributes {stable_mosaic.version = 11 : i64} {
  func.func @_conv_caps_kernel(%arg0: i32, %arg1: i32, %arg2: memref<1x4x272xbf16, #tpu.memory_space<vmem>>, %arg3: memref<8x36xbf16, #tpu.memory_space<vmem>>, %arg4: memref<8x1xf32, #tpu.memory_space<vmem>>, %arg5: memref<224x196xf32, #tpu.memory_space<vmem>>, %arg6: memref<196x49xf32, #tpu.memory_space<vmem>>, %arg7: memref<49x196xf32, #tpu.memory_space<vmem>>, %arg8: memref<1x8x196xf32, #tpu.memory_space<vmem>>) attributes {dimension_semantics = [#tpu.dimension_semantics<parallel>, #tpu.dimension_semantics<parallel>], iteration_bounds = array<i64: 2, 1>, scalar_prefetch = 0 : i64, scratch_operands = 0 : i64, tpu.core_type = #tpu.core_type<tc>, window_params = [{transform_indices = @transform_0, window_bounds = array<i64: 1, 4, 272>}, {transform_indices = @transform_1, window_bounds = array<i64: 8, 36>}, {transform_indices = @transform_2, window_bounds = array<i64: 8, 1>}, {pipeline_mode = #tpu.pipeline_mode<synchronous>, transform_indices = @transform_3, window_bounds = array<i64: 224, 196>}, {pipeline_mode = #tpu.pipeline_mode<synchronous>, transform_indices = @transform_4, window_bounds = array<i64: 196, 49>}, {pipeline_mode = #tpu.pipeline_mode<synchronous>, transform_indices = @transform_5, window_bounds = array<i64: 49, 196>}, {transform_indices = @transform_6, window_bounds = array<i64: 1, 8, 196>}]} {
    %c0 = arith.constant 0 : index
    %c0_0 = arith.constant 0 : index
    %c0_1 = arith.constant 0 : index
    %0 = vector.load %arg2[%c0, %c0_0, %c0_1] : memref<1x4x272xbf16, #tpu.memory_space<vmem>>, vector<1x4x224xbf16>
    %1 = vector.shape_cast %0 : vector<1x4x224xbf16> to vector<4x224xbf16>
    %c0_2 = arith.constant 0 : index
    %c0_3 = arith.constant 0 : index
    %c1 = arith.constant 1 : index
    %2 = vector.load %arg2[%c0_2, %c0_3, %c1] : memref<1x4x272xbf16, #tpu.memory_space<vmem>>, vector<1x4x224xbf16>
    %3 = vector.shape_cast %2 : vector<1x4x224xbf16> to vector<4x224xbf16>
    %c0_4 = arith.constant 0 : index
    %c0_5 = arith.constant 0 : index
    %c2 = arith.constant 2 : index
    %4 = vector.load %arg2[%c0_4, %c0_5, %c2] : memref<1x4x272xbf16, #tpu.memory_space<vmem>>, vector<1x4x224xbf16>
    %5 = vector.shape_cast %4 : vector<1x4x224xbf16> to vector<4x224xbf16>
    %c0_6 = arith.constant 0 : index
    %c0_7 = arith.constant 0 : index
    %c16 = arith.constant 16 : index
    %6 = vector.load %arg2[%c0_6, %c0_7, %c16] : memref<1x4x272xbf16, #tpu.memory_space<vmem>>, vector<1x4x224xbf16>
    %7 = vector.shape_cast %6 : vector<1x4x224xbf16> to vector<4x224xbf16>
    %c0_8 = arith.constant 0 : index
    %c0_9 = arith.constant 0 : index
    %c17 = arith.constant 17 : index
    %8 = vector.load %arg2[%c0_8, %c0_9, %c17] : memref<1x4x272xbf16, #tpu.memory_space<vmem>>, vector<1x4x224xbf16>
    %9 = vector.shape_cast %8 : vector<1x4x224xbf16> to vector<4x224xbf16>
    %c0_10 = arith.constant 0 : index
    %c0_11 = arith.constant 0 : index
    %c18 = arith.constant 18 : index
    %10 = vector.load %arg2[%c0_10, %c0_11, %c18] : memref<1x4x272xbf16, #tpu.memory_space<vmem>>, vector<1x4x224xbf16>
    %11 = vector.shape_cast %10 : vector<1x4x224xbf16> to vector<4x224xbf16>
    %c0_12 = arith.constant 0 : index
    %c0_13 = arith.constant 0 : index
    %c32 = arith.constant 32 : index
    %12 = vector.load %arg2[%c0_12, %c0_13, %c32] : memref<1x4x272xbf16, #tpu.memory_space<vmem>>, vector<1x4x224xbf16>
    %13 = vector.shape_cast %12 : vector<1x4x224xbf16> to vector<4x224xbf16>
    %c0_14 = arith.constant 0 : index
    %c0_15 = arith.constant 0 : index
    %c33 = arith.constant 33 : index
    %14 = vector.load %arg2[%c0_14, %c0_15, %c33] : memref<1x4x272xbf16, #tpu.memory_space<vmem>>, vector<1x4x224xbf16>
    %15 = vector.shape_cast %14 : vector<1x4x224xbf16> to vector<4x224xbf16>
    %c0_16 = arith.constant 0 : index
    %c0_17 = arith.constant 0 : index
    %c34 = arith.constant 34 : index
    %16 = vector.load %arg2[%c0_16, %c0_17, %c34] : memref<1x4x272xbf16, #tpu.memory_space<vmem>>, vector<1x4x224xbf16>
    %17 = vector.shape_cast %16 : vector<1x4x224xbf16> to vector<4x224xbf16>
    %18 = tpu.concatenate %1, %3, %5, %7, %9, %11, %13, %15, %17 in 0 : vector<4x224xbf16>, vector<4x224xbf16>, vector<4x224xbf16>, vector<4x224xbf16>, vector<4x224xbf16>, vector<4x224xbf16>, vector<4x224xbf16>, vector<4x224xbf16>, vector<4x224xbf16> -> vector<36x224xbf16>
    %c0_18 = arith.constant 0 : index
    %c0_19 = arith.constant 0 : index
    %19 = vector.load %arg3[%c0_18, %c0_19] : memref<8x36xbf16, #tpu.memory_space<vmem>>, vector<8x36xbf16>
    %cst = arith.constant dense<0.000000e+00> : vector<8x224xf32>
    %20 = tpu.matmul %19, %18, %cst {dimension_numbers = #tpu.dot_dimension_numbers<[1], [0], [0], [1], [0, 0, 1, 1], [], []>} : vector<8x36xbf16>, vector<36x224xbf16>, vector<8x224xf32> -> vector<8x224xf32>
    %c0_20 = arith.constant 0 : index
    %c0_21 = arith.constant 0 : index
    %21 = vector.load %arg5[%c0_20, %c0_21] : memref<224x196xf32, #tpu.memory_space<vmem>>, vector<224x196xf32>
    %cst_22 = arith.constant dense<0.000000e+00> : vector<8x196xf32>
    %22 = tpu.matmul %20, %21, %cst_22 {dimension_numbers = #tpu.dot_dimension_numbers<[1], [0], [0], [1], [0, 0, 1, 1], [], []>} : vector<8x224xf32>, vector<224x196xf32>, vector<8x196xf32> -> vector<8x196xf32>
    %c0_23 = arith.constant 0 : index
    %c0_24 = arith.constant 0 : index
    %23 = vector.load %arg4[%c0_23, %c0_24] : memref<8x1xf32, #tpu.memory_space<vmem>>, vector<8x1xf32>
    %24 = vector.broadcast %23 : vector<8x1xf32> to vector<8x196xf32>
    %25 = arith.addf %22, %24 : vector<8x196xf32>
    %26 = arith.mulf %25, %25 : vector<8x196xf32>
    %c0_25 = arith.constant 0 : index
    %c0_26 = arith.constant 0 : index
    %27 = vector.load %arg6[%c0_25, %c0_26] : memref<196x49xf32, #tpu.memory_space<vmem>>, vector<196x49xf32>
    %cst_27 = arith.constant dense<0.000000e+00> : vector<8x49xf32>
    %28 = tpu.matmul %26, %27, %cst_27 {dimension_numbers = #tpu.dot_dimension_numbers<[1], [0], [0], [1], [0, 0, 1, 1], [], []>} : vector<8x196xf32>, vector<196x49xf32>, vector<8x49xf32> -> vector<8x49xf32>
    %cst_28 = arith.constant 1.000000e+00 : f32
    %29 = vector.broadcast %cst_28 : f32 to vector<8x49xf32>
    %30 = arith.addf %29, %28 : vector<8x49xf32>
    %31 = math.sqrt %28 : vector<8x49xf32>
    %cst_29 = arith.constant 9.99999993E-9 : f32
    %32 = vector.broadcast %cst_29 : f32 to vector<8x49xf32>
    %33 = arith.addf %31, %32 : vector<8x49xf32>
    %34 = arith.mulf %30, %33 : vector<8x49xf32>
    %35 = arith.divf %28, %34 : vector<8x49xf32>
    %c0_30 = arith.constant 0 : index
    %c0_31 = arith.constant 0 : index
    %36 = vector.load %arg7[%c0_30, %c0_31] : memref<49x196xf32, #tpu.memory_space<vmem>>, vector<49x196xf32>
    %cst_32 = arith.constant dense<0.000000e+00> : vector<8x196xf32>
    %37 = tpu.matmul %35, %36, %cst_32 {dimension_numbers = #tpu.dot_dimension_numbers<[1], [0], [0], [1], [0, 0, 1, 1], [], []>} : vector<8x49xf32>, vector<49x196xf32>, vector<8x196xf32> -> vector<8x196xf32>
    %38 = arith.mulf %25, %37 : vector<8x196xf32>
    %c0_33 = arith.constant 0 : index
    %c0_34 = arith.constant 0 : index
    %c0_35 = arith.constant 0 : index
    %39 = vector.load %arg8[%c0_33, %c0_34, %c0_35] : memref<1x8x196xf32, #tpu.memory_space<vmem>>, vector<1x8x196xf32>
    %40 = vector.shape_cast %39 : vector<1x8x196xf32> to vector<8x196xf32>
    %41 = vector.shape_cast %38 : vector<8x196xf32> to vector<1x8x196xf32>
    tpu.vector_store %arg8[%c0_33, %c0_34, %c0_35], %41 {strides = array<i32>} : memref<1x8x196xf32, #tpu.memory_space<vmem>>, vector<1x8x196xf32>,
    return
  }
  func.func @transform_0(%arg0: i32, %arg1: i32) -> (i32, i32, i32) {
    %c0_i32 = arith.constant 0 : i32
    %c0_i32_0 = arith.constant 0 : i32
    %c0_i32_1 = arith.constant 0 : i32
    return %arg0, %c0_i32, %c0_i32_0 : i32, i32, i32
  }
  func.func @transform_1(%arg0: i32, %arg1: i32) -> (i32, i32) {
    %c0_i32 = arith.constant 0 : i32
    %c0_i32_0 = arith.constant 0 : i32
    return %arg1, %c0_i32 : i32, i32
  }
  func.func @transform_2(%arg0: i32, %arg1: i32) -> (i32, i32) {
    %c0_i32 = arith.constant 0 : i32
    %c0_i32_0 = arith.constant 0 : i32
    return %arg1, %c0_i32 : i32, i32
  }
  func.func @transform_3(%arg0: i32, %arg1: i32) -> (i32, i32) {
    %c0_i32 = arith.constant 0 : i32
    %c0_i32_0 = arith.constant 0 : i32
    %c0_i32_1 = arith.constant 0 : i32
    return %c0_i32, %c0_i32_0 : i32, i32
  }
  func.func @transform_4(%arg0: i32, %arg1: i32) -> (i32, i32) {
    %c0_i32 = arith.constant 0 : i32
    %c0_i32_0 = arith.constant 0 : i32
    %c0_i32_1 = arith.constant 0 : i32
    return %c0_i32, %c0_i32_0 : i32, i32
  }
  func.func @transform_5(%arg0: i32, %arg1: i32) -> (i32, i32) {
    %c0_i32 = arith.constant 0 : i32
    %c0_i32_0 = arith.constant 0 : i32
    %c0_i32_1 = arith.constant 0 : i32
    return %c0_i32, %c0_i32_0 : i32, i32
  }
  func.func @transform_6(%arg0: i32, %arg1: i32) -> (i32, i32, i32) {
    %c0_i32 = arith.constant 0 : i32
    %c0_i32_0 = arith.constant 0 : i32
    return %arg0, %arg1, %c0_i32 : i32, i32, i32
  }
}

</mosaic_0001>

<llo_original>
// kernel: tpu_custom_call.1
$region0: #{tpu_custom_call.1}
  #allocation0 [shape = 'u32[]', space=smem, size = 0x4, offset = 0x4, fixed_abs, tag = 'smem constant byte address 0x4 - core index']
  #allocation1 [shape = 'u32[144,128]{1,0:T(1,128)}', space=vmem, size = 0x12000, scoped, tag = 'internal scratch']
  %s0 = inlined_call_operand.vmem [shape: bf16[2,4,272], index: 0, kind: input, shape index: {}]
  %s1 = inlined_call_operand.vmem [shape: bf16[8,36], index: 1, kind: input, shape index: {}]
  %s2 = inlined_call_operand.vmem [shape: f32[8,1], index: 2, kind: input, shape index: {}]
  %s3 = inlined_call_operand.vmem [shape: f32[224,196], index: 3, kind: input, shape index: {}]
  %s4 = inlined_call_operand.vmem [shape: f32[196,49], index: 4, kind: input, shape index: {}]
  %s5 = inlined_call_operand.vmem [shape: f32[49,196], index: 5, kind: input, shape index: {}]
  %s6 = inlined_call_operand.hbm [shape: f32[2,8,196], index: 6, kind: output, shape index: {}]
  %s7 = sld [smem:[#allocation0]]
  $region57: #{tpu_custom_call.1} parent=0
    _
  %s9 = ssub.s32 1, %s7
  %s10 = scalar_select 0, %s9, %s7
  $region1: #{tpu_custom_call.1} parent=0
    #allocation2 [shape = 'u8[16384]{0}', space=vmem, size = 0x4000, scoped, tag = 'output window, operand 0']
    #allocation3 [shape = 's32[2]{0}', space=sflag, size = 0x8, scoped, tag = 'scoped memory for tpu_custom_call.1']
    %11 = vsyncpa [#allocation3], 0
    %s12 = scalar_lea.sflag [#allocation3], 1
    %13 = vsyncpa %s12, 0
    loop: start=0, step=1, limit=4
    $region2: #{tpu_custom_call.1} parent=1 // loop_pre_header
      _
    $region3: #{tpu_custom_call.1} parent=1 // loop_header
      %s15 = sphi 0, %s19
      %p16 = scmp.ge.s32.totalorder %s15, 4
      %s22 = sphi 0, %s34
      %s23 = sphi 0, %s30
      %s24 = sphi 0, %s22
      %s25 = sphi 0, %s23
      %s26 = sphi 0, %s24
      %s27 = sphi 0, %s25
      %s37 = sphi 0, %s39
      %s40 = sphi 0, %s37
      %s41 = sphi 0, %s40
      %s57 = sphi 0, %s41
      %s63 = sphi 0, %s65
      %s66 = sphi 0, %s63
      %s67 = sphi 0, %s66
      %s83 = sphi 0, %s67
      %s89 = sphi 0, %s91
      %s92 = sphi 0, %s89
      %s93 = sphi 0, %s92
      %s109 = sphi 0, %s93
      %s113 = sphi 0, %s113
      %s115 = sphi 0, %s113
      %s116 = sphi 0, %s115
      %s130 = sphi 0, %s116
      %s134 = sphi 0, %s134
      %s136 = sphi 0, %s134
      %s137 = sphi 0, %s136
      %s151 = sphi 0, %s137
      %s155 = sphi 0, %s155
      %s157 = sphi 0, %s155
      %s158 = sphi 0, %s157
      %s172 = sphi 0, %s158
      %s180 = sphi 0, %s182
      %s183 = sphi 0, %s180
      %s184 = sphi 0, %s183
      %s200 = sphi 0, %s184
    $region4: #{tpu_custom_call.1} parent=1 // loop_header_branch
      %18 = sbr.rel (%p16) target = $region8
    $region5: #{tpu_custom_call.1} parent=1 // loop_body
      %s20 = ssub.s32 %s15, 1
      %s21 = ssub.s32 %s15, 2
      %s28 = sadd.s32 1, %s23
      %p29 = scmp.ge.s32.totalorder %s28, 1
      %s30 = scalar_select %p29, 0, %s28
      %s31 = sadd.s32 1, %s22
      %s32 = scalar_select %p29, %s31, %s22
      %p33 = scmp.ge.s32.totalorder %s32, 2
      %s34 = scalar_select %p33, 0, %s32
      %s35 = ssub.s32 %s22, %s34
      %p36 = scmp.eq.s32.totalorder %s35, 0
      %s38 = sadd.s32 %s37, 1
      %s39 = scalar_select %p36, %s37, %s38
      %p42 = pneg %p36
      %p43 = scmp.eq.s32.totalorder %s15, 1
      %p44 = por %p42, %p43
      %p45 = scmp.ne.s32.totalorder %s37, %s40
      %p46 = scmp.eq.s32.totalorder %s15, 0
      %p47 = por %p45, %p46
      %p48 = scmp.ne.s32.totalorder %s37, %s40
      %p49 = scmp.eq.s32.totalorder %s20, 1
      %p50 = por %p48, %p49
      %p51 = scmp.ne.s32.totalorder %s40, %s41
      %p52 = scmp.eq.s32.totalorder %s20, 0
      %p53 = por %p51, %p52
      %p54 = scmp.ne.s32.totalorder %s40, %s41
      %p55 = scmp.eq.s32.totalorder %s21, 1
      %p56 = por %p54, %p55
      %p58 = scmp.ne.s32.totalorder %s41, %s57
      %p59 = scmp.eq.s32.totalorder %s21, 0
      %p60 = por %p58, %p59
      %s61 = ssub.s32 %s23, %s30
      %p62 = scmp.eq.s32.totalorder %s61, 0
      %s64 = sadd.s32 %s63, 1
      %s65 = scalar_select %p62, %s63, %s64
      %p68 = pneg %p62
      %p69 = scmp.eq.s32.totalorder %s15, 1
      %p70 = por %p68, %p69
      %p71 = scmp.ne.s32.totalorder %s63, %s66
      %p72 = scmp.eq.s32.totalorder %s15, 0
      %p73 = por %p71, %p72
      %p74 = scmp.ne.s32.totalorder %s63, %s66
      %p75 = scmp.eq.s32.totalorder %s20, 1
      %p76 = por %p74, %p75
      %p77 = scmp.ne.s32.totalorder %s66, %s67
      %p78 = scmp.eq.s32.totalorder %s20, 0
      %p79 = por %p77, %p78
      %p80 = scmp.ne.s32.totalorder %s66, %s67
      %p81 = scmp.eq.s32.totalorder %s21, 1
      %p82 = por %p80, %p81
      %p84 = scmp.ne.s32.totalorder %s67, %s83
      %p85 = scmp.eq.s32.totalorder %s21, 0
      %p86 = por %p84, %p85
      %s87 = ssub.s32 %s23, %s30
      %p88 = scmp.eq.s32.totalorder %s87, 0
      %s90 = sadd.s32 %s89, 1
      %s91 = scalar_select %p88, %s89, %s90
      %p94 = pneg %p88
      %p95 = scmp.eq.s32.totalorder %s15, 1
      %p96 = por %p94, %p95
      %p97 = scmp.ne.s32.totalorder %s89, %s92
      %p98 = scmp.eq.s32.totalorder %s15, 0
      %p99 = por %p97, %p98
      %p100 = scmp.ne.s32.totalorder %s89, %s92
      %p101 = scmp.eq.s32.totalorder %s20, 1
      %p102 = por %p100, %p101
      %p103 = scmp.ne.s32.totalorder %s92, %s93
      %p104 = scmp.eq.s32.totalorder %s20, 0
      %p105 = por %p103, %p104
      %p106 = scmp.ne.s32.totalorder %s92, %s93
      %p107 = scmp.eq.s32.totalorder %s21, 1
      %p108 = por %p106, %p107
      %p110 = scmp.ne.s32.totalorder %s93, %s109
      %p111 = scmp.eq.s32.totalorder %s21, 0
      %p112 = por %p110, %p111
      %s114 = sadd.s32 %s113, 1
      %p117 = scmp.eq.s32.totalorder %s15, 1
      %p118 = scmp.ne.s32.totalorder %s113, %s115
      %p119 = scmp.eq.s32.totalorder %s15, 0
      %p120 = por %p118, %p119
      %p121 = scmp.ne.s32.totalorder %s113, %s115
      %p122 = scmp.eq.s32.totalorder %s20, 1
      %p123 = por %p121, %p122
      %p124 = scmp.ne.s32.totalorder %s115, %s116
      %p125 = scmp.eq.s32.totalorder %s20, 0
      %p126 = por %p124, %p125
      %p127 = scmp.ne.s32.totalorder %s115, %s116
      %p128 = scmp.eq.s32.totalorder %s21, 1
      %p129 = por %p127, %p128
      %p131 = scmp.ne.s32.totalorder %s116, %s130
      %p132 = scmp.eq.s32.totalorder %s21, 0
      %p133 = por %p131, %p132
      %s135 = sadd.s32 %s134, 1
      %p138 = scmp.eq.s32.totalorder %s15, 1
      %p139 = scmp.ne.s32.totalorder %s134, %s136
      %p140 = scmp.eq.s32.totalorder %s15, 0
      %p141 = por %p139, %p140
      %p142 = scmp.ne.s32.totalorder %s134, %s136
      %p143 = scmp.eq.s32.totalorder %s20, 1
      %p144 = por %p142, %p143
      %p145 = scmp.ne.s32.totalorder %s136, %s137
      %p146 = scmp.eq.s32.totalorder %s20, 0
      %p147 = por %p145, %p146
      %p148 = scmp.ne.s32.totalorder %s136, %s137
      %p149 = scmp.eq.s32.totalorder %s21, 1
      %p150 = por %p148, %p149
      %p152 = scmp.ne.s32.totalorder %s137, %s151
      %p153 = scmp.eq.s32.totalorder %s21, 0
      %p154 = por %p152, %p153
      %s156 = sadd.s32 %s155, 1
      %p159 = scmp.eq.s32.totalorder %s15, 1
      %p160 = scmp.ne.s32.totalorder %s155, %s157
      %p161 = scmp.eq.s32.totalorder %s15, 0
      %p162 = por %p160, %p161
      %p163 = scmp.ne.s32.totalorder %s155, %s157
      %p164 = scmp.eq.s32.totalorder %s20, 1
      %p165 = por %p163, %p164
      %p166 = scmp.ne.s32.totalorder %s157, %s158
      %p167 = scmp.eq.s32.totalorder %s20, 0
      %p168 = por %p166, %p167
      %p169 = scmp.ne.s32.totalorder %s157, %s158
      %p170 = scmp.eq.s32.totalorder %s21, 1
      %p171 = por %p169, %p170
      %p173 = scmp.ne.s32.totalorder %s158, %s172
      %p174 = scmp.eq.s32.totalorder %s21, 0
      %p175 = por %p173, %p174
      %s176 = ssub.s32 %s22, %s34
      %s177 = ssub.s32 %s23, %s30
      %s178 = sor.u32 %s176, %s177
      %p179 = scmp.eq.s32.totalorder %s178, 0
      %s181 = sadd.s32 %s180, 1
      %s182 = scalar_select %p179, %s180, %s181
      %p185 = pneg %p179
      %p186 = scmp.eq.s32.totalorder %s15, 1
      %p187 = por %p185, %p186
      %p188 = scmp.ne.s32.totalorder %s180, %s183
      %p189 = scmp.eq.s32.totalorder %s15, 0
      %p190 = por %p188, %p189
      %p191 = scmp.ne.s32.totalorder %s180, %s183
      %p192 = scmp.eq.s32.totalorder %s20, 1
      %p193 = por %p191, %p192
      %p194 = scmp.ne.s32.totalorder %s183, %s184
      %p195 = scmp.eq.s32.totalorder %s20, 0
      %p196 = por %p194, %p195
      %p197 = scmp.ne.s32.totalorder %s183, %s184
      %p198 = scmp.eq.s32.totalorder %s21, 1
      %p199 = por %p197, %p198
      %p201 = scmp.ne.s32.totalorder %s184, %s200
      %p202 = scmp.eq.s32.totalorder %s21, 0
      %p203 = por %p201, %p202
      %p204 = scmp.le.s32.totalorder 1, %s15
      %p205 = scmp.lt.s32.totalorder %s15, 3
      %p206 = pnand %p204, %p205
      %p207 = pneg %p206
      // Predicated region
      $region9: #{tpu_custom_call.1} parent=5 // pred_check
        _
      $region10: #{tpu_custom_call.1} parent=5 // pred_check_branch
        %209 = sbr.rel (%p206) target = $region12
      $region11: #{tpu_custom_call.1} parent=5 // pred_region
        %s210 = ssub.s32 %s15, 1
        // Predicated region
        $region13: #{tpu_custom_call.1} parent=11 // pred_check
          %p211 = pneg %p79
        $region14: #{tpu_custom_call.1} parent=11 // pred_check_branch
          %213 = sbr.rel (%p211) target = $region16
        $region15: #{tpu_custom_call.1} parent=11 // pred_region
          %p214 = scmp.lt.s32.totalorder %s25, 0
          %s215 = scalar_select %p214, %s25, 0
          %s216 = smul.addr %s215, 4
          %s217 = scalar_lea.vmem %s1, %s216
        $region16: #{tpu_custom_call.1} parent=11 // pred_fallthru
          _
        // Predicated region
        $region17: #{tpu_custom_call.1} parent=11 // pred_check
          %p218 = pneg %p105
        $region18: #{tpu_custom_call.1} parent=11 // pred_check_branch
          %220 = sbr.rel (%p218) target = $region20
        $region19: #{tpu_custom_call.1} parent=11 // pred_region
          %p221 = scmp.lt.s32.totalorder %s25, 0
          %s222 = scalar_select %p221, %s25, 0
          %s223 = smul.addr %s222, 8
          %s224 = scalar_lea.vmem %s2, %s223
        $region20: #{tpu_custom_call.1} parent=11 // pred_fallthru
          _
        // Predicated region
        $region21: #{tpu_custom_call.1} parent=11 // pred_check
          %p225 = pneg %p126
        $region22: #{tpu_custom_call.1} parent=11 // pred_check_branch
          %227 = sbr.rel (%p225) target = $region24
        $region23: #{tpu_custom_call.1} parent=11 // pred_region
          _
        $region24: #{tpu_custom_call.1} parent=11 // pred_fallthru
          _
        // Predicated region
        $region25: #{tpu_custom_call.1} parent=11 // pred_check
          %p228 = pneg %p147
        $region26: #{tpu_custom_call.1} parent=11 // pred_check_branch
          %230 = sbr.rel (%p228) target = $region28
        $region27: #{tpu_custom_call.1} parent=11 // pred_region
          _
        $region28: #{tpu_custom_call.1} parent=11 // pred_fallthru
          _
        // Predicated region
        $region29: #{tpu_custom_call.1} parent=11 // pred_check
          %p231 = pneg %p168
        $region30: #{tpu_custom_call.1} parent=11 // pred_check_branch
          %233 = sbr.rel (%p231) target = $region32
        $region31: #{tpu_custom_call.1} parent=11 // pred_region
          _
        $region32: #{tpu_custom_call.1} parent=11 // pred_fallthru
          _
      $region12: #{tpu_custom_call.1} parent=5 // pred_fallthru
        _
      %p234 = scmp.lt.s32.totalorder %s15, 2
      // Predicated region
      $region33: #{tpu_custom_call.1} parent=5 // pred_check
        %p235 = pneg %p234
      $region34: #{tpu_custom_call.1} parent=5 // pred_check_branch
        %237 = sbr.rel (%p235) target = $region36
      $region35: #{tpu_custom_call.1} parent=5 // pred_region
        // Predicated region
        $region37: #{tpu_custom_call.1} parent=35 // pred_check
          %p238 = pneg %p47
        $region38: #{tpu_custom_call.1} parent=35 // pred_check_branch
          %240 = sbr.rel (%p238) target = $region40
        $region39: #{tpu_custom_call.1} parent=35 // pred_region
          %p241 = scmp.lt.s32.totalorder %s22, 1
          %s242 = scalar_select %p241, %s22, 1
          %s243 = smul.addr %s242, 3
          %s244 = smul.addr %s243, 2
          %s245 = scalar_lea.vmem %s0, %s244
        $region40: #{tpu_custom_call.1} parent=35 // pred_fallthru
          _
      $region36: #{tpu_custom_call.1} parent=5 // pred_fallthru
        _
      %p246 = scmp.le.s32.totalorder 1, %s15
      %p247 = scmp.lt.s32.totalorder %s15, 3
      %p248 = pnand %p246, %p247
      %p249 = pneg %p248
      // Predicated region
      $region41: #{tpu_custom_call.1} parent=5 // pred_check
        _
      $region42: #{tpu_custom_call.1} parent=5 // pred_check_branch
        %251 = sbr.rel (%p248) target = $region44
      $region43: #{tpu_custom_call.1} parent=5 // pred_region
        %s252 = ssub.s32 %s15, 1
        %p253 = scmp.lt.s32.totalorder %s24, 1
        %s254 = scalar_select %p253, %s24, 1
        %s255 = smul.addr %s254, 3
        %s256 = smul.addr %s255, 2
        %s257 = scalar_lea.vmem %s0, %s256
        %p258 = pneg %p53
        %p259 = pneg %p50
        %p260 = scmp.lt.s32.totalorder %s25, 0
        %s261 = scalar_select %p260, %s25, 0
        %s262 = smul.addr %s261, 4
        %s263 = scalar_lea.vmem %s1, %s262
        %p264 = pneg %p79
        %p265 = pneg %p76
        %p266 = scmp.lt.s32.totalorder %s25, 0
        %s267 = scalar_select %p266, %s25, 0
        %s268 = smul.addr %s267, 8
        %s269 = scalar_lea.vmem %s2, %s268
        %p270 = pneg %p105
        %p271 = pneg %p102
        %p272 = pneg %p126
        %p273 = pneg %p123
        %p274 = pneg %p147
        %p275 = pneg %p144
        %p276 = pneg %p168
        %p277 = pneg %p165
        %p278 = pneg %p196
        %p279 = pneg %p193
        %s280 = sand.u32 %s183, 1
        %s281 = scalar_lea.sflag [#allocation3], %s280
        %s282 = sand.u32 %s183, 1
        %s283 = smul.addr %s282, 16
        %s284 = scalar_lea.vmem [#allocation2], %s283
        %p285 = scmp.lt.s32.totalorder %s24, 1
        %s286 = scalar_select %p285, %s24, 1
        %s287 = smul.addr %s286, 3
        %s288 = smul.addr %s287, 2
        %s289 = scalar_lea.vmem %s0, %s288
        %p290 = scmp.lt.s32.totalorder %s25, 0
        %s291 = scalar_select %p290, %s25, 0
        %s292 = smul.addr %s291, 4
        %s293 = scalar_lea.vmem %s1, %s292
        %p294 = scmp.lt.s32.totalorder %s25, 0
        %s295 = scalar_select %p294, %s25, 0
        %s296 = smul.addr %s295, 8
        %s297 = scalar_lea.vmem %s2, %s296
        %v299 = vld [vmem:[%s289] sm:$0xf]
        %v300 = vld [vmem:[%s289] sm:$0x3f]
        %v303 = vunpack.c.l.s4 1983009808
        %v304 = vunpack.c.0.s8 %v303
        %v305 = vlaneseq
        %v306 = vshrl.u32 %v305, 7
        %v307 = vsub.s32 %v304, %v306
        %v308 = vrot.slane %v299, %v307
        %v309 = vcombine.high %v308, %v308
        %v310 = vcombine.low %v299, %v299
        %v312 = vunpack.c.l.s4 1983009808
        %v313 = vunpack.c.0.s8 %v312
        %v314 = vlaneseq
        %v315 = vshrl.u32 %v314, 7
        %v316 = vsub.s32 %v313, %v315
        %v317 = vrot.slane %v310, %v316
        %v318 = vcombine.high %v317, %v317
        %319 = vrot.lane.b32.xlu0 %v317, 127
        %v320 = vpop.permute.xlu0 %319
        %321 = vrot.lane.b32.xlu0 %v318, 127
        %v322 = vpop.permute.xlu0 %321
        %vm323 = vcmask 1039360
        %v324 = vsel %vm323, %v320, %v322
        %v325 = vcombine.low %v308, %v308
        %326 = vrot.lane.b32.xlu0 %v325, 126
        %v327 = vpop.permute.xlu0 %326
        %328 = vrot.lane.b32.xlu0 %v308, 126
        %v329 = vpop.permute.xlu0 %328
        %vm330 = vcmask 1031168
        %v331 = vsel %vm330, %v327, %v329
        %v332 = vcombine.low %v317, %v317
        %333 = vrot.lane.b32.xlu0 %v332, 112
        %v334 = vpop.permute.xlu0 %333
        %335 = vrot.lane.b32.xlu0 %v317, 112
        %v336 = vpop.permute.xlu0 %335
        %vm337 = vcmask 916480
        %v338 = vsel %vm337, %v334, %v336
        %339 = vrot.lane.b32.xlu0 %v308, 111
        %v340 = vpop.permute.xlu0 %339
        %341 = vrot.lane.b32.xlu0 %v309, 111
        %v342 = vpop.permute.xlu0 %341
        %vm343 = vcmask 908288
        %v344 = vsel %vm343, %v340, %v342
        %345 = vrot.lane.b32.xlu0 %v317, 110
        %v346 = vpop.permute.xlu0 %345
        %347 = vrot.lane.b32.xlu0 %v318, 110
        %v348 = vpop.permute.xlu0 %347
        %vm349 = vcmask 900096
        %v350 = vsel %vm349, %v346, %v348
        %351 = vrot.lane.b32.xlu0 %v325, 96
        %v352 = vpop.permute.xlu0 %351
        %353 = vrot.lane.b32.xlu0 %v308, 96
        %v354 = vpop.permute.xlu0 %353
        %vm355 = vcmask 785408
        %v356 = vsel %vm355, %v352, %v354
        %v358 = vcombine.low %v300, %v300
        %v360 = vunpack.c.l.s4 1983009808
        %v361 = vunpack.c.0.s8 %v360
        %v362 = vlaneseq
        %v363 = vshrl.u32 %v362, 7
        %v364 = vsub.s32 %v361, %v363
        %v365 = vrot.slane %v358, %v364
        %v367 = vunpack.c.l.s4 1983009808
        %v368 = vunpack.c.0.s8 %v367
        %v369 = vlaneseq
        %v370 = vshrl.u32 %v369, 7
        %v371 = vsub.s32 %v368, %v370
        %v372 = vrot.slane %v300, %v371
        %v373 = vcombine.low %v365, %v365
        %v374 = vcombine.low %v372, %v372
        %375 = vrot.lane.b32.xlu0 %v373, 95
        %v376 = vpop.permute.xlu0 %375
        %377 = vrot.lane.b32.xlu0 %v365, 95
        %v378 = vpop.permute.xlu0 %377
        %379 = vrot.lane.b32.xlu0 %v374, 95
        %v380 = vpop.permute.xlu0 %379
        %vm381 = vcmask 777216
        %v382 = vsel %vm381, %v376, %v378
        %v383 = vsel %vm381, %v378, %v380
        %v384 = vcombine.high %v300, %v300
        %v386 = vunpack.c.l.s4 1983009808
        %v387 = vunpack.c.0.s8 %v386
        %v388 = vlaneseq
        %v389 = vshrl.u32 %v388, 7
        %v390 = vsub.s32 %v387, %v389
        %v391 = vrot.slane %v384, %v390
        %v392 = vcombine.high %v372, %v372
        %393 = vrot.lane.b32.xlu0 %v372, 94
        %v394 = vpop.permute.xlu0 %393
        %395 = vrot.lane.b32.xlu0 %v392, 94
        %v396 = vpop.permute.xlu0 %395
        %397 = vrot.lane.b32.xlu0 %v391, 94
        %v398 = vpop.permute.xlu0 %397
        %vm399 = vcmask 769024
        %v400 = vsel %vm399, %v394, %v396
        %v401 = vsel %vm399, %v396, %v398
        %vm402 = vcmask 1041408
        %v405 = vsel %vm402, %v308, %v324
        %v408 = vsel %vm402, %v309, %v322
        %vm409 = vcmask 1043456
        %v411 = vsel %vm409, %v405, %v331
        %v413 = vsel %vm409, %v408, %v329
        %vm414 = vcmask 1045504
        %v416 = vsel %vm414, %v411, %v338
        %v419 = vsel %vm414, %v413, %v336
        %v423 = vsel %vm402, %v344, %v350
        %v426 = vsel %vm402, %v342, %v348
        %v428 = vsel %vm409, %v423, %v356
        %v430 = vsel %vm409, %v426, %v354
        %v432 = vsel %vm414, %v428, %v382
        %v435 = vsel %vm414, %v430, %v383
        %v437 = vld [vmem:[%s293] sm:$0xf]
        %vm438 = vcmask 293888
        %v440 = vsel %vm438, %v437, 0
        %v443 = vsel %vm402, %v400, 0
        %v446 = vsel %vm402, %v401, 0
        %448 = vmatprep.subr.bf16.mxu0 0
        %449 = vmatpush1.bf16.msra.mxu0 0
        %450 = vmatprep.subr.bf16.mxu0 0
        %451 = vmatpush1.bf16.msra.mxu0 0
        %452 = vmatprep.subr.bf16.mxu0 0
        %453 = vmatpush1.bf16.msra.mxu0 0
        %454 = vmatprep.subr.bf16.mxu0 0
        %455 = vmatpush1.bf16.msra.mxu0 0
        %456 = vmatprep.subr.bf16.mxu0 0
        %457 = vmatpush1.bf16.msra.mxu0 0
        %458 = vmatprep.subr.bf16.mxu0 %v446
        %459 = vmatpush1.bf16.msra.mxu0 %v443
        %460 = vmatprep.subr.bf16.mxu0 %v435
        %461 = vmatpush1.bf16.msra.mxu0 %v432
        %462 = vmatprep.subr.bf16.mxu0 %v419
        %463 = vmatpush1.bf16.msra.mxu0 %v416
        %464 = vmatprep.subr.bf16.mxu0 0
        %465 = vmatpush2.bf16.msra.mxu0 0
        %466 = vmatprep.subr.bf16.mxu0 0
        %467 = vmatpush2.bf16.msra.mxu0 0
        %468 = vmatprep.subr.bf16.mxu0 0
        %469 = vmatpush2.bf16.msra.mxu0 0
        %470 = vmatprep.subr.bf16.mxu0 0
        %471 = vmatpush2.bf16.msra.mxu0 0
        %472 = vmatprep.subr.bf16.mxu0 0
        %473 = vmatpush2.bf16.msra.mxu0 0
        %474 = vmatprep.subr.bf16.mxu0 0
        %475 = vmatpush2.bf16.msra.mxu0 0
        %476 = vmatprep.subr.bf16.mxu0 0
        %477 = vmatpush2.bf16.msra.mxu0 0
        %478 = vmatprep.subr.bf16.mxu0 0
        %479 = vmatpush2.bf16.msra.mxu0 0
        %480 = vmatprep.mubr.bf16.mxu0 0
        %481 = vmatmul.mubr.bf16.gmra.mxu0 %v440
        %v482 = vpop.f32.mrf.mxu0
        %v483 = vadd.f32 0.0, %v482
        %v484 = vpop.f32.mrf.mxu0
        %v485 = vadd.f32 0.0, %v484
        %v486 = vpop.f32.mrf.mxu0
        %v487 = vpop.f32.mrf.mxu0
        %488 = vdwg.mxu0
        %v489 = vld [vmem:[%s3] sm:$0xff]
        %v490 = vld [vmem:[%s3 + $0x8] sm:$0xff]
        %v491 = vld [vmem:[%s3 + $0x10] sm:$0xff]
        %v492 = vld [vmem:[%s3 + $0x18] sm:$0xff]
        %v493 = vld [vmem:[%s3 + $0x20] sm:$0xff]
        %v494 = vld [vmem:[%s3 + $0x28] sm:$0xff]
        %v495 = vld [vmem:[%s3 + $0x30] sm:$0xff]
        %v496 = vld [vmem:[%s3 + $0x38] sm:$0xff]
        %v497 = vld [vmem:[%s3 + $0x40] sm:$0xff]
        %v498 = vld [vmem:[%s3 + $0x48] sm:$0xff]
        %v499 = vld [vmem:[%s3 + $0x50] sm:$0xff]
        %v500 = vld [vmem:[%s3 + $0x58] sm:$0xff]
        %v501 = vld [vmem:[%s3 + $0x60] sm:$0xff]
        %v502 = vld [vmem:[%s3 + $0x68] sm:$0xff]
        %v503 = vld [vmem:[%s3 + $0x70] sm:$0xff]
        %v504 = vld [vmem:[%s3 + $0x78] sm:$0xff]
        %v505 = vld [vmem:[%s3 + $0x80] sm:$0xff]
        %v506 = vld [vmem:[%s3 + $0x88] sm:$0xff]
        %v507 = vld [vmem:[%s3 + $0x90] sm:$0xff]
        %v508 = vld [vmem:[%s3 + $0x98] sm:$0xff]
        %v509 = vld [vmem:[%s3 + $0xa0] sm:$0xff]
        %v510 = vld [vmem:[%s3 + $0xa8] sm:$0xff]
        %v511 = vld [vmem:[%s3 + $0xb0] sm:$0xff]
        %v512 = vld [vmem:[%s3 + $0xb8] sm:$0xff]
        %v513 = vld [vmem:[%s3 + $0xc0] sm:$0xff]
        %v514 = vld [vmem:[%s3 + $0xc8] sm:$0xff]
        %v515 = vld [vmem:[%s3 + $0xd0] sm:$0xff]
        %v516 = vld [vmem:[%s3 + $0xd8] sm:$0xff]
        %v517 = vld [vmem:[%s3 + $0xe0] sm:$0xff]
        %v518 = vld [vmem:[%s3 + $0xe8] sm:$0xff]
        %v519 = vld [vmem:[%s3 + $0xf0] sm:$0xff]
        %v520 = vld [vmem:[%s3 + $0xf8] sm:$0xff]
        %v521 = vld [vmem:[%s3 + $0x100] sm:$0xff]
        %v522 = vld [vmem:[%s3 + $0x108] sm:$0xff]
        %v523 = vld [vmem:[%s3 + $0x110] sm:$0xff]
        %v524 = vld [vmem:[%s3 + $0x118] sm:$0xff]
        %v525 = vld [vmem:[%s3 + $0x120] sm:$0xff]
        %v526 = vld [vmem:[%s3 + $0x128] sm:$0xff]
        %v527 = vld [vmem:[%s3 + $0x130] sm:$0xff]
        %v528 = vld [vmem:[%s3 + $0x138] sm:$0xff]
        %v529 = vld [vmem:[%s3 + $0x140] sm:$0xff]
        %v530 = vld [vmem:[%s3 + $0x148] sm:$0xff]
        %v531 = vld [vmem:[%s3 + $0x150] sm:$0xff]
        %v532 = vld [vmem:[%s3 + $0x158] sm:$0xff]
        %v533 = vld [vmem:[%s3 + $0x160] sm:$0xff]
        %v534 = vld [vmem:[%s3 + $0x168] sm:$0xff]
        %v535 = vld [vmem:[%s3 + $0x170] sm:$0xff]
        %v536 = vld [vmem:[%s3 + $0x178] sm:$0xff]
        %v537 = vld [vmem:[%s3 + $0x180] sm:$0xff]
        %v538 = vld [vmem:[%s3 + $0x188] sm:$0xff]
        %v539 = vld [vmem:[%s3 + $0x190] sm:$0xff]
        %v540 = vld [vmem:[%s3 + $0x198] sm:$0xff]
        %v541 = vld [vmem:[%s3 + $0x1a0] sm:$0xff]
        %v542 = vld [vmem:[%s3 + $0x1a8] sm:$0xff]
        %v543 = vld [vmem:[%s3 + $0x1b0] sm:$0xff]
        %v544 = vld [vmem:[%s3 + $0x1b8] sm:$0xff]
        %v545 = vld [vmem:[%s297] sm:$0xff]
        %547 = vset.pattern.permute.xlu0 0
        %548 = vperm.xlu0 %547, %v545
        %v549 = vpop.permute.xlu0 %548
        %vm551 = vcmask 785408
        %v553 = vsel %vm551, %v485, 0
        %555 = vmatprep.subr.mxu0 %v520
        %556 = vmatpush1.msra.mxu0 %v519
        %557 = vmatprep.subr.mxu0 %v518
        %558 = vmatpush1.msra.mxu0 %v517
        %559 = vmatprep.subr.mxu0 %v516
        %560 = vmatpush1.msra.mxu0 %v515
        %561 = vmatprep.subr.mxu0 %v514
        %562 = vmatpush1.msra.mxu0 %v513
        %563 = vmatprep.subr.mxu0 %v512
        %564 = vmatpush1.msra.mxu0 %v511
        %565 = vmatprep.subr.mxu0 %v510
        %566 = vmatpush1.msra.mxu0 %v509
        %567 = vmatprep.subr.mxu0 %v508
        %568 = vmatpush1.msra.mxu0 %v507
        %569 = vmatprep.subr.mxu0 %v506
        %570 = vmatpush1.msra.mxu0 %v505
        %571 = vmatprep.subr.mxu0 %v504
        %572 = vmatpush1.msra.mxu0 %v503
        %573 = vmatprep.subr.mxu0 %v502
        %574 = vmatpush1.msra.mxu0 %v501
        %575 = vmatprep.subr.mxu0 %v500
        %576 = vmatpush1.msra.mxu0 %v499
        %577 = vmatprep.subr.mxu0 %v498
        %578 = vmatpush1.msra.mxu0 %v497
        %579 = vmatprep.subr.mxu0 %v496
        %580 = vmatpush1.msra.mxu0 %v495
        %581 = vmatprep.subr.mxu0 %v494
        %582 = vmatpush1.msra.mxu0 %v493
        %583 = vmatprep.subr.mxu0 %v492
        %584 = vmatpush1.msra.mxu0 %v491
        %585 = vmatprep.subr.mxu0 %v490
        %586 = vmatpush1.msra.mxu0 %v489
        %587 = vmatprep.subr.mxu0 0.0
        %588 = vmatpush2.msra.mxu0 0.0
        %589 = vmatprep.subr.mxu0 0.0
        %590 = vmatpush2.msra.mxu0 0.0
        %591 = vmatprep.subr.mxu0 0.0
        %592 = vmatpush2.msra.mxu0 0.0
        %593 = vmatprep.subr.mxu0 0.0
        %594 = vmatpush2.msra.mxu0 0.0
        %595 = vmatprep.subr.mxu0 %v544
        %596 = vmatpush2.msra.mxu0 %v543
        %597 = vmatprep.subr.mxu0 %v542
        %598 = vmatpush2.msra.mxu0 %v541
        %599 = vmatprep.subr.mxu0 %v540
        %600 = vmatpush2.msra.mxu0 %v539
        %601 = vmatprep.subr.mxu0 %v538
        %602 = vmatpush2.msra.mxu0 %v537
        %603 = vmatprep.subr.mxu0 %v536
        %604 = vmatpush2.msra.mxu0 %v535
        %605 = vmatprep.subr.mxu0 %v534
        %606 = vmatpush2.msra.mxu0 %v533
        %607 = vmatprep.subr.mxu0 %v532
        %608 = vmatpush2.msra.mxu0 %v531
        %609 = vmatprep.subr.mxu0 %v530
        %610 = vmatpush2.msra.mxu0 %v529
        %611 = vmatprep.subr.mxu0 %v528
        %612 = vmatpush2.msra.mxu0 %v527
        %613 = vmatprep.subr.mxu0 %v526
        %614 = vmatpush2.msra.mxu0 %v525
        %615 = vmatprep.subr.mxu0 %v524
        %616 = vmatpush2.msra.mxu0 %v523
        %617 = vmatprep.subr.mxu0 %v522
        %618 = vmatpush2.msra.mxu0 %v521
        %619 = vmatprep.mubr.f32.mxu0 %v553
        %620 = vmatmul.mubr.f32.gmra.mxu0 %v483
        %v621 = vpop.f32.mrf.mxu0
        %v622 = vadd.f32 %v549, %v621
        %v623 = vpop.f32.mrf.mxu0
        %v624 = vadd.f32 %v549, %v623
        %625 = vdwg.mxu0
        %v626 = vmul.f32 %v622, %v622
        %v627 = vmul.f32 %v624, %v624
        %v628 = vld [vmem:[%s4] sm:$0xff]
        %v629 = vld [vmem:[%s4 + $0x8] sm:$0xff]
        %v630 = vld [vmem:[%s4 + $0x10] sm:$0xff]
        %v631 = vld [vmem:[%s4 + $0x18] sm:$0xff]
        %v632 = vld [vmem:[%s4 + $0x20] sm:$0xff]
        %v633 = vld [vmem:[%s4 + $0x28] sm:$0xff]
        %v634 = vld [vmem:[%s4 + $0x30] sm:$0xff]
        %v635 = vld [vmem:[%s4 + $0x38] sm:$0xff]
        %v636 = vld [vmem:[%s4 + $0x40] sm:$0xff]
        %v637 = vld [vmem:[%s4 + $0x48] sm:$0xff]
        %v638 = vld [vmem:[%s4 + $0x50] sm:$0xff]
        %v639 = vld [vmem:[%s4 + $0x58] sm:$0xff]
        %v640 = vld [vmem:[%s4 + $0x60] sm:$0xff]
        %v641 = vld [vmem:[%s4 + $0x68] sm:$0xff]
        %v642 = vld [vmem:[%s4 + $0x70] sm:$0xff]
        %v643 = vld [vmem:[%s4 + $0x78] sm:$0xff]
        %v644 = vld [vmem:[%s4 + $0x80] sm:$0xff]
        %v645 = vld [vmem:[%s4 + $0x88] sm:$0xff]
        %v646 = vld [vmem:[%s4 + $0x90] sm:$0xff]
        %v647 = vld [vmem:[%s4 + $0x98] sm:$0xff]
        %v648 = vld [vmem:[%s4 + $0xa0] sm:$0xff]
        %v649 = vld [vmem:[%s4 + $0xa8] sm:$0xff]
        %v650 = vld [vmem:[%s4 + $0xb0] sm:$0xff]
        %v651 = vld [vmem:[%s4 + $0xb8] sm:$0xff]
        %v652 = vld [vmem:[%s4 + $0xc0] sm:$0xf]
        %vm653 = vcmask 556032
        %v655 = vsel %vm653, %v627, 0
        %v658 = vsel %vm409, %v652, 0
        %660 = vmatprep.subr.mxu0 0.0
        %661 = vmatpush1.msra.mxu0 %v643
        %662 = vmatprep.subr.mxu0 0.0
        %663 = vmatpush1.msra.mxu0 %v642
        %664 = vmatprep.subr.mxu0 0.0
        %665 = vmatpush1.msra.mxu0 %v641
        %666 = vmatprep.subr.mxu0 0.0
        %667 = vmatpush1.msra.mxu0 %v640
        %668 = vmatprep.subr.mxu0 0.0
        %669 = vmatpush1.msra.mxu0 %v639
        %670 = vmatprep.subr.mxu0 0.0
        %671 = vmatpush1.msra.mxu0 %v638
        %672 = vmatprep.subr.mxu0 0.0
        %673 = vmatpush1.msra.mxu0 %v637
        %674 = vmatprep.subr.mxu0 0.0
        %675 = vmatpush1.msra.mxu0 %v636
        %676 = vmatprep.subr.mxu0 0.0
        %677 = vmatpush1.msra.mxu0 %v635
        %678 = vmatprep.subr.mxu0 0.0
        %679 = vmatpush1.msra.mxu0 %v634
        %680 = vmatprep.subr.mxu0 0.0
        %681 = vmatpush1.msra.mxu0 %v633
        %682 = vmatprep.subr.mxu0 0.0
        %683 = vmatpush1.msra.mxu0 %v632
        %684 = vmatprep.subr.mxu0 0.0
        %685 = vmatpush1.msra.mxu0 %v631
        %686 = vmatprep.subr.mxu0 0.0
        %687 = vmatpush1.msra.mxu0 %v630
        %688 = vmatprep.subr.mxu0 0.0
        %689 = vmatpush1.msra.mxu0 %v629
        %690 = vmatprep.subr.mxu0 0.0
        %691 = vmatpush1.msra.mxu0 %v628
        %692 = vmatprep.subr.mxu0 0.0
        %693 = vmatpush2.msra.mxu0 0.0
        %694 = vmatprep.subr.mxu0 0.0
        %695 = vmatpush2.msra.mxu0 0.0
        %696 = vmatprep.subr.mxu0 0.0
        %697 = vmatpush2.msra.mxu0 0.0
        %698 = vmatprep.subr.mxu0 0.0
        %699 = vmatpush2.msra.mxu0 0.0
        %700 = vmatprep.subr.mxu0 0.0
        %701 = vmatpush2.msra.mxu0 0.0
        %702 = vmatprep.subr.mxu0 0.0
        %703 = vmatpush2.msra.mxu0 0.0
        %704 = vmatprep.subr.mxu0 0.0
        %705 = vmatpush2.msra.mxu0 0.0
        %706 = vmatprep.subr.mxu0 0.0
        %707 = vmatpush2.msra.mxu0 %v658
        %708 = vmatprep.subr.mxu0 0.0
        %709 = vmatpush2.msra.mxu0 %v651
        %710 = vmatprep.subr.mxu0 0.0
        %711 = vmatpush2.msra.mxu0 %v650
        %712 = vmatprep.subr.mxu0 0.0
        %713 = vmatpush2.msra.mxu0 %v649
        %714 = vmatprep.subr.mxu0 0.0
        %715 = vmatpush2.msra.mxu0 %v648
        %716 = vmatprep.subr.mxu0 0.0
        %717 = vmatpush2.msra.mxu0 %v647
        %718 = vmatprep.subr.mxu0 0.0
        %719 = vmatpush2.msra.mxu0 %v646
        %720 = vmatprep.subr.mxu0 0.0
        %721 = vmatpush2.msra.mxu0 %v645
        %722 = vmatprep.subr.mxu0 0.0
        %723 = vmatpush2.msra.mxu0 %v644
        %724 = vmatprep.mubr.f32.mxu0 %v655
        %725 = vmatmul.mubr.f32.gmra.mxu0 %v626
        %v726 = vpop.f32.mrf.mxu0
        %v727 = vadd.f32 0.0, %v726
        %v728 = vpop.f32.mrf.mxu0
        %729 = vdwg.mxu0
        %v730 = vadd.f32 %v727, 1.0
        %v731 = vrsqrt.pop %v727
        %v732 = vmul.f32 %v727, %v731
        %vm733 = vcmp.eq.f32.partialorder %v727, inf
        %v734 = vsel %vm733, %v727, %v732
        %vm735 = vcmp.eq.f32.partialorder %v727, 0.0
        %v736 = vand.u32 %v727, 2147483648
        %v737 = vsel %vm735, %v736, %v734
        %v738 = vadd.f32 %v737, 1e-08
        %v739 = vmul.f32 %v730, %v738
        %v740 = vrcp.pop %v739
        %v741 = vmul.f32 %v727, %v740
        %v742 = vld [vmem:[%s5] sm:$0xff]
        %v743 = vld [vmem:[%s5 + $0x8] sm:$0xff]
        %v744 = vld [vmem:[%s5 + $0x10] sm:$0xff]
        %v745 = vld [vmem:[%s5 + $0x18] sm:$0xff]
        %v746 = vld [vmem:[%s5 + $0x20] sm:$0xff]
        %v747 = vld [vmem:[%s5 + $0x28] sm:$0xff]
        %v748 = vld [vmem:[%s5 + $0x30] sm:$0xff]
        %v749 = vld [vmem:[%s5 + $0x38] sm:$0xff]
        %v750 = vld [vmem:[%s5 + $0x40] sm:$0xff]
        %v751 = vld [vmem:[%s5 + $0x48] sm:$0xff]
        %v752 = vld [vmem:[%s5 + $0x50] sm:$0xff]
        %v753 = vld [vmem:[%s5 + $0x58] sm:$0xff]
        %v754 = vld [vmem:[%s5 + $0x60] sm:$0x1]
        %v755 = vld [vmem:[%s5 + $0x68] sm:$0x1]
        %vm756 = vcmask 400384
        %v758 = vsel %vm756, %v741, 0
        %vm760 = vcmask 1040384
        %v762 = vsel %vm760, %v754, 0
        %v765 = vsel %vm760, %v755, 0
        %767 = vmatprep.subr.mxu0 0.0
        %768 = vmatpush1.msra.mxu0 0.0
        %769 = vmatprep.subr.mxu0 0.0
        %770 = vmatpush1.msra.mxu0 0.0
        %771 = vmatprep.subr.mxu0 0.0
        %772 = vmatpush1.msra.mxu0 0.0
        %773 = vmatprep.subr.mxu0 0.0
        %774 = vmatpush1.msra.mxu0 0.0
        %775 = vmatprep.subr.mxu0 0.0
        %776 = vmatpush1.msra.mxu0 0.0
        %777 = vmatprep.subr.mxu0 0.0
        %778 = vmatpush1.msra.mxu0 0.0
        %779 = vmatprep.subr.mxu0 0.0
        %780 = vmatpush1.msra.mxu0 0.0
        %781 = vmatprep.subr.mxu0 0.0
        %782 = vmatpush1.msra.mxu0 0.0
        %783 = vmatprep.subr.mxu0 0.0
        %784 = vmatpush1.msra.mxu0 0.0
        %785 = vmatprep.subr.mxu0 %v765
        %786 = vmatpush1.msra.mxu0 %v762
        %787 = vmatprep.subr.mxu0 %v753
        %788 = vmatpush1.msra.mxu0 %v752
        %789 = vmatprep.subr.mxu0 %v751
        %790 = vmatpush1.msra.mxu0 %v750
        %791 = vmatprep.subr.mxu0 %v749
        %792 = vmatpush1.msra.mxu0 %v748
        %793 = vmatprep.subr.mxu0 %v747
        %794 = vmatpush1.msra.mxu0 %v746
        %795 = vmatprep.subr.mxu0 %v745
        %796 = vmatpush1.msra.mxu0 %v744
        %797 = vmatprep.subr.mxu0 %v743
        %798 = vmatpush1.msra.mxu0 %v742
        %799 = vmatprep.subr.mxu0 0.0
        %800 = vmatpush2.msra.mxu0 0.0
        %801 = vmatprep.subr.mxu0 0.0
        %802 = vmatpush2.msra.mxu0 0.0
        %803 = vmatprep.subr.mxu0 0.0
        %804 = vmatpush2.msra.mxu0 0.0
        %805 = vmatprep.subr.mxu0 0.0
        %806 = vmatpush2.msra.mxu0 0.0
        %807 = vmatprep.subr.mxu0 0.0
        %808 = vmatpush2.msra.mxu0 0.0
        %809 = vmatprep.subr.mxu0 0.0
        %810 = vmatpush2.msra.mxu0 0.0
        %811 = vmatprep.subr.mxu0 0.0
        %812 = vmatpush2.msra.mxu0 0.0
        %813 = vmatprep.subr.mxu0 0.0
        %814 = vmatpush2.msra.mxu0 0.0
        %815 = vmatprep.subr.mxu0 0.0
        %816 = vmatpush2.msra.mxu0 0.0
        %817 = vmatprep.subr.mxu0 0.0
        %818 = vmatpush2.msra.mxu0 0.0
        %819 = vmatprep.subr.mxu0 0.0
        %820 = vmatpush2.msra.mxu0 0.0
        %821 = vmatprep.subr.mxu0 0.0
        %822 = vmatpush2.msra.mxu0 0.0
        %823 = vmatprep.subr.mxu0 0.0
        %824 = vmatpush2.msra.mxu0 0.0
        %825 = vmatprep.subr.mxu0 0.0
        %826 = vmatpush2.msra.mxu0 0.0
        %827 = vmatprep.subr.mxu0 0.0
        %828 = vmatpush2.msra.mxu0 0.0
        %829 = vmatprep.subr.mxu0 0.0
        %830 = vmatpush2.msra.mxu0 0.0
        %831 = vmatprep.mubr.f32.mxu0 0.0
        %832 = vmatmul.mubr.f32.gmra.mxu0 %v758
        %v833 = vpop.f32.mrf.mxu0
        %v834 = vadd.f32 0.0, %v833
        %v835 = vpop.f32.mrf.mxu0
        %v836 = vadd.f32 0.0, %v835
        %837 = vdwg.mxu0
        %v838 = vmul.f32 %v622, %v834
        %v839 = vmul.f32 %v624, %v836
        %840 = vst [vmem:[%s284] sm:$0xff] %v838
        %841 = vst.msk [vmem:[%s284 + $0x8] sm:$0xff] %vm653, %v839
        %s842 = sand.u32 %s183, 1
        %s843 = scalar_lea.sflag [#allocation3], %s842
        %s844 = sand.u32 %s183, 1
        %s845 = smul.addr %s844, 16
        %s846 = scalar_lea.vmem [#allocation2], %s845
        // Predicated region
        $region45: #{tpu_custom_call.1} parent=43 // pred_check
          %p847 = pneg %p193
        $region46: #{tpu_custom_call.1} parent=43 // pred_check_branch
          %849 = sbr.rel (%p847) target = $region48
        $region47: #{tpu_custom_call.1} parent=43 // pred_region
          %s851 = ssub.s32 256, 256
          %852 = vsyncadd %s843, %s851
          %s853 = smul.addr %s25, 2
          %s854 = smul.addr %s24, 2
          %s855 = sadd.s32 %s853, %s854
          %s856 = smul.addr %s855, 128
          %s857 = scalar_lea.hbm %s6, %s856
          %s859 = sshll.u32 %s846, 4
          %s860 = int_to_ptr.vmem [resolvable:$true] %s859
          %862 = dma.vmem_to_hbm [thread:$0]  %s860, 256, %s857, %s843
        $region48: #{tpu_custom_call.1} parent=43 // pred_fallthru
          _
      $region44: #{tpu_custom_call.1} parent=5 // pred_fallthru
        _
      %p863 = scmp.le.s32.totalorder 2, %s15
      // Predicated region
      $region49: #{tpu_custom_call.1} parent=5 // pred_check
        %p864 = pneg %p863
      $region50: #{tpu_custom_call.1} parent=5 // pred_check_branch
        %866 = sbr.rel (%p864) target = $region52
      $region51: #{tpu_custom_call.1} parent=5 // pred_region
        %s867 = ssub.s32 %s15, 2
        // Predicated region
        $region53: #{tpu_custom_call.1} parent=51 // pred_check
          %p868 = pneg %p199
        $region54: #{tpu_custom_call.1} parent=51 // pred_check_branch
          %870 = sbr.rel (%p868) target = $region56
        $region55: #{tpu_custom_call.1} parent=51 // pred_region
          %s871 = sand.u32 %s184, 1
          %s872 = scalar_lea.sflag [#allocation3], %s871
          %s873 = sand.u32 %s184, 1
          %s874 = smul.addr %s873, 16
          %s875 = scalar_lea.vmem [#allocation2], %s874
          %876 = dma.done %s872, 256
        $region56: #{tpu_custom_call.1} parent=51 // pred_fallthru
          _
      $region52: #{tpu_custom_call.1} parent=5 // pred_fallthru
        _
    $region6: #{tpu_custom_call.1} parent=1 // loop_footer
      %s19 = sadd.s32 1, %s15
    $region7: #{tpu_custom_call.1} parent=1 // loop_footer_branch
      %14 = sbr.rel target = $region3
    $region8: #{tpu_custom_call.1} parent=1 // loop_exit
      _
    %877 = vsyncpa [#allocation3], 1
    %s878 = scalar_lea.sflag [#allocation3], 1
    %879 = vsyncpa %s878, 1

</llo_original>
